<compile_context>
chip_gen: v7x
topology: tpu7x:2x2x1
jax: 0.10.0
libtpu: 0.0.40
codegen_flags: <defaults>
</compile_context>

<pallas_src>
import jax
import jax.numpy as jnp
from jax.experimental import pallas as pl
from jax.experimental.pallas import tpu as pltpu


def _round_up(x, m):
    return ((x + m - 1) // m) * m


def _masknll_kernel(recon_ref, target_ref, mask_ref, partial_ref, gather_sc):
    """Grid = (row_blocks [parallel], vocab_blocks [arbitrary])."""
    kv = pl.program_id(1)
    nv = pl.num_programs(1)
    tv = recon_ref.shape[1]

    @pl.when(kv == 0)
    def _():
        gather_sc[...] = jnp.zeros_like(gather_sc)

    probs = recon_ref[...]                                   # (tm, tv), native dtype
    tgt = target_ref[...]                                    # (tm, 1) int32

    # Fused one-hot gather of probs[i, tgt[i]] restricted to this vocab tile.
    col = jax.lax.broadcasted_iota(jnp.int32, probs.shape, 1) + kv * tv
    sel = jnp.where(col == tgt, probs, jnp.zeros_like(probs))
    # Exactly one nonzero per row across all vocab tiles -> sum is exact even in bf16.
    gather_sc[...] += jnp.sum(sel, axis=1, keepdims=True).astype(jnp.float32)

    @pl.when(kv == nv - 1)
    def _():
        msk = mask_ref[...]                                  # (tm, 1) f32 (0.0 / 1.0)
        gathered = gather_sc[...]                            # (tm, 1) f32
        # Guard: masked-out rows must contribute exactly 0 (no inf*0 NaN).
        ce = jnp.where(msk > 0, -jnp.log(gathered), 0.0)     # (tm, 1)
        block_sum = jnp.sum(ce)
        block_cnt = jnp.sum(msk)
        # Lane-dense partial slab: sublane 0 = masked-CE sum, sublane 1 = count.
        sub = jax.lax.broadcasted_iota(jnp.int32, partial_ref.shape, 1)
        partial_ref[...] = jnp.where(
            sub == 0, block_sum, jnp.where(sub == 1, block_cnt, 0.0))


def mask_nll_loss(reconstructed, target, mask, *, tm=None, tv=None,
                  vmem_limit_bytes=48 * 1024 * 1024):
    """Returns (loss: f32 scalar, n_total: i32 scalar)."""
    N, V = reconstructed.shape
    dtype = reconstructed.dtype
    itemsize = jnp.dtype(dtype).itemsize
    pack = max(8, 32 // itemsize)          # sublane packing: f32 -> 8, bf16 -> 16

    # Vocab tiling: keep the whole vocab in one block when modest, otherwise
    # sweep it with lane-aligned tiles on an inner 'arbitrary' grid axis.
    if tv is None:
        tv = V if V <= 4096 else 2048
    if tv >= V:
        tv, Vp = V, V
    else:
        tv = max(128, (tv // 128) * 128)
        Vp = _round_up(V, tv)

    # Row tiling: as large as an ~8 MiB per-buffer budget allows (double
    # buffered by the pipeline), capped at 512 rows and at the (padded) N.
    if tm is None:
        budget = 8 * 1024 * 1024
        tm = min(512, max(pack, budget // (tv * itemsize)))
    tm = max(pack, (tm // pack) * pack)
    tm = min(tm, _round_up(N, pack))
    Np = _round_up(N, tm)

    # Padding: padded rows carry mask=0 (and target=0), so they contribute 0.
    recon = reconstructed
    if Np != N or Vp != V:
        recon = jnp.pad(recon, ((0, Np - N), (0, Vp - V)))
    tgt2d = jnp.pad(target.astype(jnp.int32), (0, Np - N)).reshape(Np, 1)
    msk2d = jnp.pad(mask.astype(jnp.float32), (0, Np - N)).reshape(Np, 1)

    gr, gv = Np // tm, Vp // tv

    partial = pl.pallas_call(
        _masknll_kernel,
        out_shape=jax.ShapeDtypeStruct((gr, 8, 128), jnp.float32),
        grid_spec=pltpu.PrefetchScalarGridSpec(
            num_scalar_prefetch=0,
            grid=(gr, gv),
            in_specs=[
                pl.BlockSpec((tm, tv), lambda i, kv: (i, kv)),  # probabilities (native dtype)
                pl.BlockSpec((tm, 1), lambda i, kv: (i, 0)),    # target column (fetched once per row block)
                pl.BlockSpec((tm, 1), lambda i, kv: (i, 0)),    # mask column
            ],
            out_specs=pl.BlockSpec((1, 8, 128), lambda i, kv: (i, 0, 0)),
            scratch_shapes=[pltpu.VMEM((tm, 1), jnp.float32)],  # gathered p(target) accumulator
        ),
        compiler_params=pltpu.CompilerParams(
            dimension_semantics=("parallel", "arbitrary"),
            vmem_limit_bytes=vmem_limit_bytes),
    )(recon, tgt2d, msk2d)

    sums = partial[:, 0, 0]
    cnts = partial[:, 1, 0]
    n_total = jnp.sum(cnts)
    loss = jnp.sum(sums) / n_total   # NaN if mask is all-False (matches torch mean of empty)
    # TODO(synk): PyTorch returns n_total.item() (host int); we return a device i32 scalar.
    return loss, n_total.astype(jnp.int32)


def _reference(recon_f32, target, mask):
    n = recon_f32.shape[0]
    ce = -jnp.log(recon_f32[jnp.arange(n), target])
    m = mask.astype(jnp.float32)
    return jnp.sum(ce * m) / jnp.sum(m), jnp.sum(mask.astype(jnp.int32))


if __name__ == "__main__":
    key = jax.random.PRNGKey(0)

    # --- test 1: f32 probabilities, aligned shapes ---------------------------
    k1, k2, k3, key = jax.random.split(key, 4)
    N, V = 64, 128
    logits = jax.random.normal(k1, (N, V), dtype=jnp.float32)
    recon = jax.nn.softmax(logits, axis=-1)
    target = jax.random.randint(k2, (N,), 0, V, dtype=jnp.int32)
    mask = jax.random.bernoulli(k3, 0.7, (N,))
    mask = mask.at[0].set(True)

    loss, n_total = mask_nll_loss(recon, target, mask)
    jax.block_until_ready((loss, n_total))
    loss_ref, n_ref = _reference(recon, target, mask)
    assert jnp.allclose(loss, loss_ref, rtol=1e-5, atol=1e-6), (loss, loss_ref)
    assert int(n_total) == int(n_ref), (n_total, n_ref)

    # --- test 2: bf16 streaming, ragged N/V, forced vocab tiling --------------
    k1, k2, k3, key = jax.random.split(key, 4)
    N2, V2 = 70, 300
    logits2 = jax.random.normal(k1, (N2, V2), dtype=jnp.float32)
    recon2 = jax.nn.softmax(logits2, axis=-1).astype(jnp.bfloat16)
    target2 = jax.random.randint(k2, (N2,), 0, V2, dtype=jnp.int32)
    mask2 = jax.random.bernoulli(k3, 0.6, (N2,))
    mask2 = mask2.at[0].set(True)

    loss2, n_total2 = mask_nll_loss(recon2, target2, mask2, tv=128)
    jax.block_until_ready((loss2, n_total2))
    loss2_ref, n2_ref = _reference(recon2.astype(jnp.float32), target2, mask2)
    assert jnp.allclose(loss2, loss2_ref, rtol=1e-3, atol=1e-4), (loss2, loss2_ref)
    assert int(n_total2) == int(n2_ref), (n_total2, n2_ref)

    print("KERNEL_OK")
</pallas_src>

<mosaic_0001>
module attributes {stable_mosaic.version = 11 : i64} {
  func.func @_masknll_kernel(%arg0: i32, %arg1: i32, %arg2: memref<64x128xf32, #tpu.memory_space<vmem>>, %arg3: memref<64x1xi32, #tpu.memory_space<vmem>>, %arg4: memref<64x1xf32, #tpu.memory_space<vmem>>, %arg5: memref<1x8x128xf32, #tpu.memory_space<vmem>>, %arg6: memref<64x1xf32, #tpu.memory_space<vmem>>) attributes {dimension_semantics = [#tpu.dimension_semantics<parallel>, #tpu.dimension_semantics<arbitrary>], iteration_bounds = array<i64: 1, 1>, scalar_prefetch = 0 : i64, scratch_operands = 1 : i64, tpu.core_type = #tpu.core_type<tc>, window_params = [{transform_indices = @transform_0, window_bounds = array<i64: 64, 128>}, {transform_indices = @transform_1, window_bounds = array<i64: 64, 1>}, {transform_indices = @transform_2, window_bounds = array<i64: 64, 1>}, {transform_indices = @transform_3, window_bounds = array<i64: 1, 8, 128>}]} {
    %c0_i32 = arith.constant 0 : i32
    %0 = arith.cmpi eq, %arg1, %c0_i32 : i32
    %1 = arith.extui %0 : i1 to i32
    %c0_i32_0 = arith.constant 0 : i32
    %2 = arith.cmpi ne, %1, %c0_i32_0 : i32
    scf.if %2 {
      %cst_11 = arith.constant 0.000000e+00 : f32
      %21 = vector.broadcast %cst_11 : f32 to vector<64x1xf32>
      %c0_12 = arith.constant 0 : index
      %c0_13 = arith.constant 0 : index
      %22 = vector.load %arg6[%c0_12, %c0_13] : memref<64x1xf32, #tpu.memory_space<vmem>>, vector<64x1xf32>
      tpu.vector_store %arg6[%c0_12, %c0_13], %21 {strides = array<i32>} : memref<64x1xf32, #tpu.memory_space<vmem>>, vector<64x1xf32>,
    } else {
    }
    %c0 = arith.constant 0 : index
    %c0_1 = arith.constant 0 : index
    %3 = vector.load %arg2[%c0, %c0_1] : memref<64x128xf32, #tpu.memory_space<vmem>>, vector<64x128xf32>
    %c0_2 = arith.constant 0 : index
    %c0_3 = arith.constant 0 : index
    %4 = vector.load %arg3[%c0_2, %c0_3] : memref<64x1xi32, #tpu.memory_space<vmem>>, vector<64x1xi32>
    %5 = tpu.iota {dimensions = array<i32: 1>} : vector<64x128xi32>
    %c128_i32 = arith.constant 128 : i32
    %6 = arith.muli %arg1, %c128_i32 : i32
    %7 = vector.broadcast %6 : i32 to vector<64x128xi32>
    %8 = arith.addi %5, %7 : vector<64x128xi32>
    %9 = vector.broadcast %4 : vector<64x1xi32> to vector<64x128xi32>
    %10 = arith.cmpi eq, %8, %9 : vector<64x128xi32>
    %cst = arith.constant 0.000000e+00 : f32
    %11 = vector.broadcast %cst : f32 to vector<64x128xf32>
    %12 = arith.select %10, %3, %11 : vector<64x128xi1>, vector<64x128xf32>
    %c0_4 = arith.constant 0 : index
    %c0_5 = arith.constant 0 : index
    %13 = vector.load %arg6[%c0_4, %c0_5] : memref<64x1xf32, #tpu.memory_space<vmem>>, vector<64x1xf32>
    %cst_6 = arith.constant dense<0.000000e+00> : vector<64xf32>
    %14 = vector.multi_reduction <add>, %12, %cst_6 [1] : vector<64x128xf32> to vector<64xf32>
    %15 = vector.shape_cast %14 : vector<64xf32> to vector<64x1xf32>
    %16 = arith.addf %13, %15 : vector<64x1xf32>
    %c0_7 = arith.constant 0 : index
    %c0_8 = arith.constant 0 : index
    %17 = vector.load %arg6[%c0_7, %c0_8] : memref<64x1xf32, #tpu.memory_space<vmem>>, vector<64x1xf32>
    tpu.vector_store %arg6[%c0_7, %c0_8], %16 {strides = array<i32>} : memref<64x1xf32, #tpu.memory_space<vmem>>, vector<64x1xf32>,
    %c0_i32_9 = arith.constant 0 : i32
    %18 = arith.cmpi eq, %arg1, %c0_i32_9 : i32
    %19 = arith.extui %18 : i1 to i32
    %c0_i32_10 = arith.constant 0 : i32
    %20 = arith.cmpi ne, %19, %c0_i32_10 : i32
    scf.if %20 {
      %c0_11 = arith.constant 0 : index
      %c0_12 = arith.constant 0 : index
      %21 = vector.load %arg4[%c0_11, %c0_12] : memref<64x1xf32, #tpu.memory_space<vmem>>, vector<64x1xf32>
      %c0_13 = arith.constant 0 : index
      %c0_14 = arith.constant 0 : index
      %22 = vector.load %arg6[%c0_13, %c0_14] : memref<64x1xf32, #tpu.memory_space<vmem>>, vector<64x1xf32>
      %cst_15 = arith.constant 0.000000e+00 : f32
      %23 = vector.broadcast %cst_15 : f32 to vector<64x1xf32>
      %24 = arith.cmpf ogt, %21, %23 : vector<64x1xf32>
      %25 = math.log %22 : vector<64x1xf32>
      %cst_16 = arith.constant 0.000000e+00 : f32
      %26 = vector.broadcast %cst_16 : f32 to vector<64x1xf32>
      %27 = arith.subf %26, %25 : vector<64x1xf32>
      %cst_17 = arith.constant 0.000000e+00 : f32
      %28 = vector.broadcast %cst_17 : f32 to vector<64x1xf32>
      %29 = arith.select %24, %27, %28 : vector<64x1xi1>, vector<64x1xf32>
      %30 = vector.shape_cast %29 : vector<64x1xf32> to vector<1x64x1xf32>
      %cst_18 = arith.constant dense<0.000000e+00> : vector<1xf32>
      %31 = vector.multi_reduction <add>, %30, %cst_18 [1, 2] : vector<1x64x1xf32> to vector<1xf32>
      %32 = vector.shape_cast %31 : vector<1xf32> to vector<1x1x1xf32>
      %33 = vector.extract %32[0, 0, 0] : f32 from vector<1x1x1xf32>
      %34 = vector.shape_cast %21 : vector<64x1xf32> to vector<1x64x1xf32>
      %cst_19 = arith.constant dense<0.000000e+00> : vector<1xf32>
      %35 = vector.multi_reduction <add>, %34, %cst_19 [1, 2] : vector<1x64x1xf32> to vector<1xf32>
      %36 = vector.shape_cast %35 : vector<1xf32> to vector<1x1x1xf32>
      %37 = vector.extract %36[0, 0, 0] : f32 from vector<1x1x1xf32>
      %38 = tpu.iota {dimensions = array<i32: 1>} : vector<1x8x128xi32>
      %c0_i32_20 = arith.constant 0 : i32
      %39 = vector.broadcast %c0_i32_20 : i32 to vector<1x8x128xi32>
      %40 = arith.cmpi eq, %38, %39 : vector<1x8x128xi32>
      %c1_i32 = arith.constant 1 : i32
      %41 = vector.broadcast %c1_i32 : i32 to vector<1x8x128xi32>
      %42 = arith.cmpi eq, %38, %41 : vector<1x8x128xi32>
      %cst_21 = arith.constant 0.000000e+00 : f32
      %43 = vector.broadcast %37 : f32 to vector<1x8x128xf32>
      %44 = vector.broadcast %cst_21 : f32 to vector<1x8x128xf32>
      %45 = arith.select %42, %43, %44 : vector<1x8x128xi1>, vector<1x8x128xf32>
      %46 = vector.broadcast %33 : f32 to vector<1x8x128xf32>
      %47 = arith.select %40, %46, %45 : vector<1x8x128xi1>, vector<1x8x128xf32>
      %c0_22 = arith.constant 0 : index
      %c0_23 = arith.constant 0 : index
      %c0_24 = arith.constant 0 : index
      %48 = vector.load %arg5[%c0_22, %c0_23, %c0_24] : memref<1x8x128xf32, #tpu.memory_space<vmem>>, vector<1x8x128xf32>
      tpu.vector_store %arg5[%c0_22, %c0_23, %c0_24], %47 {strides = array<i32>} : memref<1x8x128xf32, #tpu.memory_space<vmem>>, vector<1x8x128xf32>,
    } else {
    }
    return
  }
  func.func @transform_0(%arg0: i32, %arg1: i32) -> (i32, i32) {
    %c0_i32 = arith.constant 0 : i32
    return %arg0, %arg1 : i32, i32
  }
  func.func @transform_1(%arg0: i32, %arg1: i32) -> (i32, i32) {
    %c0_i32 = arith.constant 0 : i32
    %c0_i32_0 = arith.constant 0 : i32
    return %arg0, %c0_i32 : i32, i32
  }
  func.func @transform_2(%arg0: i32, %arg1: i32) -> (i32, i32) {
    %c0_i32 = arith.constant 0 : i32
    %c0_i32_0 = arith.constant 0 : i32
    return %arg0, %c0_i32 : i32, i32
  }
  func.func @transform_3(%arg0: i32, %arg1: i32) -> (i32, i32, i32) {
    %c0_i32 = arith.constant 0 : i32
    %c0_i32_0 = arith.constant 0 : i32
    %c0_i32_1 = arith.constant 0 : i32
    return %arg0, %c0_i32, %c0_i32_0 : i32, i32, i32
  }
}

</mosaic_0001>

<llo_original>
// kernel: tpu_custom_call.1
$region0: #{tpu_custom_call.1}
  #allocation0 [shape = 'u32[]', space=smem, size = 0x4, offset = 0x4, fixed_abs, tag = 'smem constant byte address 0x4 - core index']
  #allocation1 [shape = 'u32[144,128]{1,0:T(1,128)}', space=vmem, size = 0x12000, scoped, tag = 'internal scratch']
  #allocation2 [shape = 'f32[64,1]{1,0:T(8,128)}', space=vmem, size = 0x8000, scoped, tag = 'scratch operand']
  %s0 = inlined_call_operand.vmem [shape: f32[64,128], index: 0, kind: input, shape index: {}]
  %s1 = inlined_call_operand.vmem [shape: s32[64,1], index: 1, kind: input, shape index: {}]
  %s2 = inlined_call_operand.vmem [shape: f32[64,1], index: 2, kind: input, shape index: {}]
  %s3 = inlined_call_operand.hbm [shape: f32[1,8,128], index: 3, kind: output, shape index: {}]
  %s4 = sld [smem:[#allocation0]]
  $region30: #{tpu_custom_call.1} parent=0
    _
  %s6 = ssub.s32 1, %s4
  %s7 = scalar_select 0, %s6, %s4
  $region1: #{tpu_custom_call.1} parent=0
    #allocation3 [shape = 'u8[4096]{0}', space=vmem, size = 0x1000, scoped, tag = 'output window, operand 0, single buffered']
    #allocation4 [shape = 's32[1]{0}', space=sflag, size = 0x4, scoped, tag = 'scoped memory for tpu_custom_call.1']
    %8 = vsyncpa [#allocation4], 0
    // Predicated region
    $region2: #{tpu_custom_call.1} parent=1 // pred_check
      _
    $region3: #{tpu_custom_call.1} parent=1 // pred_check_branch
      %10 = sbr.rel (0) target = $region5
    $region4: #{tpu_custom_call.1} parent=1 // pred_region
      _
    $region5: #{tpu_custom_call.1} parent=1 // pred_fallthru
      _
    // Predicated region
    $region6: #{tpu_custom_call.1} parent=1 // pred_check
      _
    $region7: #{tpu_custom_call.1} parent=1 // pred_check_branch
      %12 = sbr.rel (0) target = $region9
    $region8: #{tpu_custom_call.1} parent=1 // pred_region
      _
    $region9: #{tpu_custom_call.1} parent=1 // pred_fallthru
      _
    // Predicated region
    $region10: #{tpu_custom_call.1} parent=1 // pred_check
      _
    $region11: #{tpu_custom_call.1} parent=1 // pred_check_branch
      %14 = sbr.rel (0) target = $region13
    $region12: #{tpu_custom_call.1} parent=1 // pred_region
      _
    $region13: #{tpu_custom_call.1} parent=1 // pred_fallthru
      _
    %p15 = scmp.eq.s32.totalorder 0, 0
    // Predicated region
    $region14: #{tpu_custom_call.1} parent=1 // pred_check
      %p16 = pneg %p15
    $region15: #{tpu_custom_call.1} parent=1 // pred_check_branch
      %18 = sbr.rel (%p16) target = $region17
    $region16: #{tpu_custom_call.1} parent=1 // pred_region
      %vm19 = vcmask 7168
      %20 = vst.msk [vmem:[#allocation2] sm:$0xff] %vm19, 0.0
      %21 = vst.msk [vmem:[#allocation2 + $0x8] sm:$0xff] %vm19, 0.0
      %22 = vst.msk [vmem:[#allocation2 + $0x10] sm:$0xff] %vm19, 0.0
      %23 = vst.msk [vmem:[#allocation2 + $0x18] sm:$0xff] %vm19, 0.0
      %24 = vst.msk [vmem:[#allocation2 + $0x20] sm:$0xff] %vm19, 0.0
      %25 = vst.msk [vmem:[#allocation2 + $0x28] sm:$0xff] %vm19, 0.0
      %26 = vst.msk [vmem:[#allocation2 + $0x30] sm:$0xff] %vm19, 0.0
      %27 = vst.msk [vmem:[#allocation2 + $0x38] sm:$0xff] %vm19, 0.0
    $region17: #{tpu_custom_call.1} parent=1 // pred_fallthru
      _
    %v28 = vld [vmem:[%s0] sm:$0xff]
    %v29 = vld [vmem:[%s0 + $0x8] sm:$0xff]
    %v30 = vld [vmem:[%s0 + $0x10] sm:$0xff]
    %v31 = vld [vmem:[%s0 + $0x18] sm:$0xff]
    %v32 = vld [vmem:[%s0 + $0x20] sm:$0xff]
    %v33 = vld [vmem:[%s0 + $0x28] sm:$0xff]
    %v34 = vld [vmem:[%s0 + $0x30] sm:$0xff]
    %v35 = vld [vmem:[%s0 + $0x38] sm:$0xff]
    %v36 = vld [vmem:[%s1] sm:$0xff]
    %v37 = vld [vmem:[%s1 + $0x8] sm:$0xff]
    %v38 = vld [vmem:[%s1 + $0x10] sm:$0xff]
    %v39 = vld [vmem:[%s1 + $0x18] sm:$0xff]
    %v40 = vld [vmem:[%s1 + $0x20] sm:$0xff]
    %v41 = vld [vmem:[%s1 + $0x28] sm:$0xff]
    %v42 = vld [vmem:[%s1 + $0x30] sm:$0xff]
    %v43 = vld [vmem:[%s1 + $0x38] sm:$0xff]
    %v44 = vlaneseq
    %v45 = vand.u32 %v44, 127
    %s46 = smul.u32 0, 128
    %v47 = vstv %s46
    %v48 = vadd.s32 %v45, %v47
    %49 = vset.pattern.permute.xlu0 0
    %50 = vperm.xlu0 %49, %v36
    %v51 = vpop.permute.xlu0 %50
    %52 = vset.pattern.permute.xlu0 0
    %53 = vperm.xlu0 %52, %v37
    %v54 = vpop.permute.xlu0 %53
    %55 = vset.pattern.permute.xlu0 0
    %56 = vperm.xlu0 %55, %v38
    %v57 = vpop.permute.xlu0 %56
    %58 = vset.pattern.permute.xlu0 0
    %59 = vperm.xlu0 %58, %v39
    %v60 = vpop.permute.xlu0 %59
    %61 = vset.pattern.permute.xlu0 0
    %62 = vperm.xlu0 %61, %v40
    %v63 = vpop.permute.xlu0 %62
    %64 = vset.pattern.permute.xlu0 0
    %65 = vperm.xlu0 %64, %v41
    %v66 = vpop.permute.xlu0 %65
    %67 = vset.pattern.permute.xlu0 0
    %68 = vperm.xlu0 %67, %v42
    %v69 = vpop.permute.xlu0 %68
    %70 = vset.pattern.permute.xlu0 0
    %71 = vperm.xlu0 %70, %v43
    %v72 = vpop.permute.xlu0 %71
    %vm73 = vcmp.eq.s32.totalorder %v48, %v51
    %vm74 = vcmp.eq.s32.totalorder %v48, %v54
    %vm75 = vcmp.eq.s32.totalorder %v48, %v57
    %vm76 = vcmp.eq.s32.totalorder %v48, %v60
    %vm77 = vcmp.eq.s32.totalorder %v48, %v63
    %vm78 = vcmp.eq.s32.totalorder %v48, %v66
    %vm79 = vcmp.eq.s32.totalorder %v48, %v69
    %vm80 = vcmp.eq.s32.totalorder %v48, %v72
    %v81 = vsel %vm73, %v28, 0.0
    %v82 = vsel %vm74, %v29, 0.0
    %v83 = vsel %vm75, %v30, 0.0
    %v84 = vsel %vm76, %v31, 0.0
    %v85 = vsel %vm77, %v32, 0.0
    %v86 = vsel %vm78, %v33, 0.0
    %v87 = vsel %vm79, %v34, 0.0
    %v88 = vsel %vm80, %v35, 0.0
    %v89 = vld [vmem:[#allocation2] sm:$0xff]
    %v90 = vld [vmem:[#allocation2 + $0x8] sm:$0xff]
    %v91 = vld [vmem:[#allocation2 + $0x10] sm:$0xff]
    %v92 = vld [vmem:[#allocation2 + $0x18] sm:$0xff]
    %v93 = vld [vmem:[#allocation2 + $0x20] sm:$0xff]
    %v94 = vld [vmem:[#allocation2 + $0x28] sm:$0xff]
    %v95 = vld [vmem:[#allocation2 + $0x30] sm:$0xff]
    %v96 = vld [vmem:[#allocation2 + $0x38] sm:$0xff]
    %97 = vadd.xlane.f32.xlu0 %v81
    %v98 = vpop.xlane.xlu0 %97
    %99 = vadd.xlane.f32.xlu0 %v82
    %v100 = vpop.xlane.xlu0 %99
    %101 = vadd.xlane.f32.xlu0 %v83
    %v102 = vpop.xlane.xlu0 %101
    %103 = vadd.xlane.f32.xlu0 %v84
    %v104 = vpop.xlane.xlu0 %103
    %105 = vadd.xlane.f32.xlu0 %v85
    %v106 = vpop.xlane.xlu0 %105
    %107 = vadd.xlane.f32.xlu0 %v86
    %v108 = vpop.xlane.xlu0 %107
    %109 = vadd.xlane.f32.xlu0 %v87
    %v110 = vpop.xlane.xlu0 %109
    %111 = vadd.xlane.f32.xlu0 %v88
    %v112 = vpop.xlane.xlu0 %111
    %v113 = vadd.f32 %v89, %v98
    %v114 = vadd.f32 %v90, %v100
    %v115 = vadd.f32 %v91, %v102
    %v116 = vadd.f32 %v92, %v104
    %v117 = vadd.f32 %v93, %v106
    %v118 = vadd.f32 %v94, %v108
    %v119 = vadd.f32 %v95, %v110
    %v120 = vadd.f32 %v96, %v112
    %vm121 = vcmask 7168
    %122 = vst.msk [vmem:[#allocation2] sm:$0xff] %vm121, %v113
    %123 = vst.msk [vmem:[#allocation2 + $0x8] sm:$0xff] %vm121, %v114
    %124 = vst.msk [vmem:[#allocation2 + $0x10] sm:$0xff] %vm121, %v115
    %125 = vst.msk [vmem:[#allocation2 + $0x18] sm:$0xff] %vm121, %v116
    %126 = vst.msk [vmem:[#allocation2 + $0x20] sm:$0xff] %vm121, %v117
    %127 = vst.msk [vmem:[#allocation2 + $0x28] sm:$0xff] %vm121, %v118
    %128 = vst.msk [vmem:[#allocation2 + $0x30] sm:$0xff] %vm121, %v119
    %129 = vst.msk [vmem:[#allocation2 + $0x38] sm:$0xff] %vm121, %v120
    // Predicated region
    $region18: #{tpu_custom_call.1} parent=1 // pred_check
      %p130 = pneg %p15
    $region19: #{tpu_custom_call.1} parent=1 // pred_check_branch
      %132 = sbr.rel (%p130) target = $region21
    $region20: #{tpu_custom_call.1} parent=1 // pred_region
      %v133 = vld [vmem:[%s2] sm:$0xff]
      %v134 = vld [vmem:[%s2 + $0x8] sm:$0xff]
      %v135 = vld [vmem:[%s2 + $0x10] sm:$0xff]
      %v136 = vld [vmem:[%s2 + $0x18] sm:$0xff]
      %v137 = vld [vmem:[%s2 + $0x20] sm:$0xff]
      %v138 = vld [vmem:[%s2 + $0x28] sm:$0xff]
      %v139 = vld [vmem:[%s2 + $0x30] sm:$0xff]
      %v140 = vld [vmem:[%s2 + $0x38] sm:$0xff]
      %v141 = vld [vmem:[#allocation2] sm:$0xff]
      %v142 = vld [vmem:[#allocation2 + $0x8] sm:$0xff]
      %v143 = vld [vmem:[#allocation2 + $0x10] sm:$0xff]
      %v144 = vld [vmem:[#allocation2 + $0x18] sm:$0xff]
      %v145 = vld [vmem:[#allocation2 + $0x20] sm:$0xff]
      %v146 = vld [vmem:[#allocation2 + $0x28] sm:$0xff]
      %v147 = vld [vmem:[#allocation2 + $0x30] sm:$0xff]
      %v148 = vld [vmem:[#allocation2 + $0x38] sm:$0xff]
      %vm149 = vcmp.gt.f32.partialorder %v133, 0.0
      %vm150 = vcmp.gt.f32.partialorder %v134, 0.0
      %vm151 = vcmp.gt.f32.partialorder %v135, 0.0
      %vm152 = vcmp.gt.f32.partialorder %v136, 0.0
      %vm153 = vcmp.gt.f32.partialorder %v137, 0.0
      %vm154 = vcmp.gt.f32.partialorder %v138, 0.0
      %vm155 = vcmp.gt.f32.partialorder %v139, 0.0
      %vm156 = vcmp.gt.f32.partialorder %v140, 0.0
      %v157 = vlog2.pop %v141
      %v158 = vmul.f32 %v157, 0.6931472
      %v159 = vlog2.pop %v142
      %v160 = vmul.f32 %v159, 0.6931472
      %v161 = vlog2.pop %v143
      %v162 = vmul.f32 %v161, 0.6931472
      %v163 = vlog2.pop %v144
      %v164 = vmul.f32 %v163, 0.6931472
      %v165 = vlog2.pop %v145
      %v166 = vmul.f32 %v165, 0.6931472
      %v167 = vlog2.pop %v146
      %v168 = vmul.f32 %v167, 0.6931472
      %v169 = vlog2.pop %v147
      %v170 = vmul.f32 %v169, 0.6931472
      %v171 = vlog2.pop %v148
      %v172 = vmul.f32 %v171, 0.6931472
      %v173 = vsub.f32 0.0, %v158
      %v174 = vsub.f32 0.0, %v160
      %v175 = vsub.f32 0.0, %v162
      %v176 = vsub.f32 0.0, %v164
      %v177 = vsub.f32 0.0, %v166
      %v178 = vsub.f32 0.0, %v168
      %v179 = vsub.f32 0.0, %v170
      %v180 = vsub.f32 0.0, %v172
      %v181 = vsel %vm149, %v173, 0.0
      %v182 = vsel %vm150, %v174, 0.0
      %v183 = vsel %vm151, %v175, 0.0
      %v184 = vsel %vm152, %v176, 0.0
      %v185 = vsel %vm153, %v177, 0.0
      %v186 = vsel %vm154, %v178, 0.0
      %v187 = vsel %vm155, %v179, 0.0
      %v188 = vsel %vm156, %v180, 0.0
      %v189 = vsel %vm121, %v181, 0.0
      %v190 = vsel %vm121, %v182, 0.0
      %v191 = vadd.f32 %v189, %v190
      %v192 = vsel %vm121, %v183, 0.0
      %v193 = vadd.f32 %v191, %v192
      %v194 = vsel %vm121, %v184, 0.0
      %v195 = vadd.f32 %v193, %v194
      %v196 = vsel %vm121, %v185, 0.0
      %v197 = vadd.f32 %v195, %v196
      %v198 = vsel %vm121, %v186, 0.0
      %v199 = vadd.f32 %v197, %v198
      %v200 = vsel %vm121, %v187, 0.0
      %v201 = vadd.f32 %v199, %v200
      %v202 = vsel %vm121, %v188, 0.0
      %v203 = vadd.f32 %v201, %v202
      %204 = vadd.xlane.f32.xlu0 %v203
      %v205 = vpop.xlane.xlu0 %204
      %v206 = vrot.slane %v205, 4
      %v207 = vadd.f32 %v205, %v206
      %v208 = vrot.slane %v207, 2
      %v209 = vadd.f32 %v207, %v208
      %v210 = vrot.slane %v209, 1
      %v211 = vadd.f32 %v209, %v210
      %s212 = vtos %v211
      %v213 = vsel %vm121, %v133, 0.0
      %v214 = vsel %vm121, %v134, 0.0
      %v215 = vadd.f32 %v213, %v214
      %v216 = vsel %vm121, %v135, 0.0
      %v217 = vadd.f32 %v215, %v216
      %v218 = vsel %vm121, %v136, 0.0
      %v219 = vadd.f32 %v217, %v218
      %v220 = vsel %vm121, %v137, 0.0
      %v221 = vadd.f32 %v219, %v220
      %v222 = vsel %vm121, %v138, 0.0
      %v223 = vadd.f32 %v221, %v222
      %v224 = vsel %vm121, %v139, 0.0
      %v225 = vadd.f32 %v223, %v224
      %v226 = vsel %vm121, %v140, 0.0
      %v227 = vadd.f32 %v225, %v226
      %228 = vadd.xlane.f32.xlu0 %v227
      %v229 = vpop.xlane.xlu0 %228
      %v230 = vrot.slane %v229, 4
      %v231 = vadd.f32 %v229, %v230
      %v232 = vrot.slane %v231, 2
      %v233 = vadd.f32 %v231, %v232
      %v234 = vrot.slane %v233, 1
      %v235 = vadd.f32 %v233, %v234
      %s236 = vtos %v235
      %v237 = vlaneseq
      %v238 = vshrl.u32 %v237, 7
      %vm239 = vcmp.eq.s32.totalorder %v238, 0
      %vm240 = vcmp.eq.s32.totalorder %v238, 1
      %v241 = vstv %s236
      %v242 = vsel %vm240, %v241, 0.0
      %v243 = vstv %s212
      %v244 = vsel %vm239, %v243, %v242
      %245 = vst [vmem:[#allocation3] sm:$0xff] %v244
    $region21: #{tpu_custom_call.1} parent=1 // pred_fallthru
      _
    // Predicated region
    $region22: #{tpu_custom_call.1} parent=1 // pred_check
      _
    $region23: #{tpu_custom_call.1} parent=1 // pred_check_branch
      %247 = sbr.rel (0) target = $region25
    $region24: #{tpu_custom_call.1} parent=1 // pred_region
      %s249 = ssub.s32 128, 128
      %250 = vsyncadd [#allocation4], %s249
      %s252 = sshll.u32 [#allocation3], 4
      %s253 = int_to_ptr.vmem [resolvable:$true] %s252
      %255 = dma.vmem_to_hbm [thread:$0]  %s253, 128, %s3, [#allocation4]
    $region25: #{tpu_custom_call.1} parent=1 // pred_fallthru
      _
    // Predicated region
    $region26: #{tpu_custom_call.1} parent=1 // pred_check
      _
    $region27: #{tpu_custom_call.1} parent=1 // pred_check_branch
      %257 = sbr.rel (0) target = $region29
    $region28: #{tpu_custom_call.1} parent=1 // pred_region
      %258 = dma.done [#allocation4], 128
    $region29: #{tpu_custom_call.1} parent=1 // pred_fallthru
      _
    %259 = vsyncpa [#allocation4], 1

</llo_original>
